<compile_context>
chip_gen: v6e
topology: v6e:2x2x1
jax: 0.10.0
libtpu: 0.0.40
codegen_flags: <defaults>
</compile_context>

<pallas_src>
import jax
import jax.numpy as jnp
from jax.experimental import pallas as pl
from jax.experimental.pallas import tpu as pltpu

_COL_CHOICES = (1024, 512, 256, 128)   # lane-dense slab widths (multiples of 128)


def _round_up(a, m):
    return ((a + m - 1) // m) * m


def _target_block_bytes():
    """Per-block VMEM budget, chosen per TPU generation (conservative default)."""
    try:
        kind = jax.devices()[0].device_kind.lower()
    except Exception:  # pragma: no cover - defensive
        kind = ""
    if ("v6" in kind) or ("v7" in kind) or ("tpu7" in kind):
        # v6e/v7x: 4 MiB blocks -> ~16 MiB double-buffered in+out, inside the
        # 32 MiB default scoped VMEM, ~>90% of HBM roofline.
        return 4 << 20
    # v5e (16 MiB default scoped VMEM) and older/unknown: 2 MiB blocks.
    return 2 << 20


def _affine_kernel(w_ref, b_ref, x_ref, o_ref):
    # w_ref: SMEM (1, 1) f32    b_ref: SMEM (1,) f32
    # x_ref/o_ref: VMEM (tile_r, cols) f32
    # y = x @ W.T + b  ==  x * w + b for a 1x1 weight — pure VPU streaming op.
    o_ref[...] = x_ref[...] * w_ref[0, 0] + b_ref[0]


def linear_1_to_1(x, weight, bias, *, min_pallas_elems=65536, donate_x=False):
    """Pallas equivalent of nn.Linear(1, 1) forward.

    x:      (N, 1) float32
    weight: (1, 1) float32   (PyTorch convention: [out_features, in_features])
    bias:   (1,)   float32
    returns (N, 1) float32
    """
    n = x.shape[0]

    if n == 0 or n < min_pallas_elems:
        # Tiny batch: let XLA fuse the affine into neighboring ops for free.
        return x * weight[0, 0] + bias[0]

    flat = x.reshape(-1)  # contiguous reshape: no data movement

    # ---- lane-dense slab, copy-free whenever N is a multiple of 128 ----
    cols = next((c for c in _COL_CHOICES if n % c == 0), None)
    if cols is None:
        # Residual case: pad only to the next 128 boundary (<=127 zeros).
        # allow_input_fusion below lets XLA fuse this pad into the kernel's
        # input rather than materializing a separate padded copy of x.
        cols = 128
        padded_n = _round_up(n, cols)
        flat = jnp.pad(flat, (0, padded_n - n))
    else:
        padded_n = n

    rows = padded_n // cols
    slab = flat.reshape(rows, cols)

    # ---- tile selection: big blocks, >=2 grid steps when possible ----
    itemsize = jnp.dtype(x.dtype).itemsize
    target_rows = max(8, _target_block_bytes() // (cols * itemsize))
    if rows <= 8:
        tile_r = rows                      # single block == full array dims
    else:
        tile_r = max(8, min(target_rows, _round_up(pl.cdiv(rows, 2), 8)))
    grid = (pl.cdiv(rows, tile_r),)        # ragged last block handled by Pallas

    out_slab = pl.pallas_call(
        _affine_kernel,
        out_shape=jax.ShapeDtypeStruct((rows, cols), x.dtype),
        grid_spec=pl.GridSpec(
            grid=grid,
            in_specs=[
                pl.BlockSpec(memory_space=pltpu.MemorySpace.SMEM),   # weight (1,1)
                pl.BlockSpec(memory_space=pltpu.MemorySpace.SMEM),   # bias   (1,)
                pl.BlockSpec((tile_r, cols), lambda i: (i, 0)),      # x slab tile
            ],
            out_specs=pl.BlockSpec((tile_r, cols), lambda i: (i, 0)),
        ),
        compiler_params=pltpu.CompilerParams(
            dimension_semantics=("parallel",),            # megacore-shard rows (v7x)
            allow_input_fusion=[False, False, True],      # fuse pad/reshape into slab input
        ),
        input_output_aliases=({2: 0} if donate_x else {}),
    )(weight, bias, slab)

    out_flat = out_slab.reshape(-1)
    if padded_n != n:
        out_flat = out_flat[:n]            # only taken on the padded residual path
    return out_flat.reshape(n, 1)


if __name__ == "__main__":
    key = jax.random.PRNGKey(0)
    kx, kw, kb, kx2, kx3 = jax.random.split(key, 5)

    # Deterministic parameter init mimicking nn.Linear(1, 1):
    # uniform(-1/sqrt(in_features), 1/sqrt(in_features)) = uniform(-1, 1)
    weight = jax.random.uniform(kw, (1, 1), dtype=jnp.float32, minval=-1.0, maxval=1.0)
    bias = jax.random.uniform(kb, (1,), dtype=jnp.float32, minval=-1.0, maxval=1.0)

    fwd = jax.jit(lambda xx, ww, bb: linear_1_to_1(xx, ww, bb, min_pallas_elems=0))

    # Case 1: tiny batch (module-consistent shape), Pallas path forced.
    N = 8
    x = jax.random.normal(kx, (N, 1), dtype=jnp.float32)
    y = jax.block_until_ready(fwd(x, weight, bias))
    y_ref = x @ weight.T + bias
    assert y.shape == (N, 1)
    assert jnp.allclose(y, y_ref, atol=1e-6, rtol=1e-6)

    # Case 2: N not a multiple of 128 -> exercises the padded residual path
    # with a 2-step ragged grid.
    N2 = 5000
    x2 = jax.random.normal(kx2, (N2, 1), dtype=jnp.float32)
    y2 = jax.block_until_ready(fwd(x2, weight, bias))
    y2_ref = x2 @ weight.T + bias
    assert y2.shape == (N2, 1)
    assert jnp.allclose(y2, y2_ref, atol=1e-6, rtol=1e-6)

    # Case 3: N a multiple of 1024 -> copy-free wide-lane slab, multi-step
    # ragged grid (1250 rows of 1024 lanes).
    N3 = 1250 * 1024
    x3 = jax.random.normal(kx3, (N3, 1), dtype=jnp.float32)
    y3 = jax.block_until_ready(fwd(x3, weight, bias))
    y3_ref = x3 * weight[0, 0] + bias[0]
    assert y3.shape == (N3, 1)
    assert jnp.allclose(y3, y3_ref, atol=1e-6, rtol=1e-6)

    print("KERNEL_OK")
</pallas_src>

<mosaic_0001>
module attributes {stable_mosaic.version = 11 : i64} {
  func.func @_affine_kernel(%arg0: i32, %arg1: memref<1x1xf32, #tpu.memory_space<smem>>, %arg2: memref<1xf32, #tpu.memory_space<smem>>, %arg3: memref<1x128xf32, #tpu.memory_space<vmem>>, %arg4: memref<1x128xf32, #tpu.memory_space<vmem>>) attributes {dimension_semantics = [#tpu.dimension_semantics<parallel>], iteration_bounds = array<i64: 1>, scalar_prefetch = 0 : i64, scratch_operands = 0 : i64, tpu.core_type = #tpu.core_type<tc>, window_params = [{transform_indices = @transform_0, window_bounds = array<i64: 1, 1>}, {transform_indices = @transform_1, window_bounds = array<i64: 1>}, {transform_indices = @transform_2, window_bounds = array<i64: 1, 128>}, {transform_indices = @transform_3, window_bounds = array<i64: 1, 128>}]} {
    %c0 = arith.constant 0 : index
    %c0_0 = arith.constant 0 : index
    %0 = vector.load %arg3[%c0, %c0_0] : memref<1x128xf32, #tpu.memory_space<vmem>>, vector<1x128xf32>
    %c0_1 = arith.constant 0 : index
    %c0_2 = arith.constant 0 : index
    %1 = memref.load %arg1[%c0_1, %c0_2] : memref<1x1xf32, #tpu.memory_space<smem>>
    %2 = vector.broadcast %1 : f32 to vector<1x128xf32>
    %3 = arith.mulf %0, %2 : vector<1x128xf32>
    %c0_3 = arith.constant 0 : index
    %4 = memref.load %arg2[%c0_3] : memref<1xf32, #tpu.memory_space<smem>>
    %5 = vector.broadcast %4 : f32 to vector<1x128xf32>
    %6 = arith.addf %3, %5 : vector<1x128xf32>
    %c0_4 = arith.constant 0 : index
    %c0_5 = arith.constant 0 : index
    %7 = vector.load %arg4[%c0_4, %c0_5] : memref<1x128xf32, #tpu.memory_space<vmem>>, vector<1x128xf32>
    tpu.vector_store %arg4[%c0_4, %c0_5], %6 {strides = array<i32>} : memref<1x128xf32, #tpu.memory_space<vmem>>, vector<1x128xf32>,
    return
  }
  func.func @transform_0(%arg0: i32) -> (i32, i32) {
    %c0_i32 = arith.constant 0 : i32
    %c0_i32_0 = arith.constant 0 : i32
    %c0_i32_1 = arith.constant 0 : i32
    return %c0_i32, %c0_i32_0 : i32, i32
  }
  func.func @transform_1(%arg0: i32) -> i32 {
    %c0_i32 = arith.constant 0 : i32
    %c0_i32_0 = arith.constant 0 : i32
    return %c0_i32 : i32
  }
  func.func @transform_2(%arg0: i32) -> (i32, i32) {
    %c0_i32 = arith.constant 0 : i32
    %c0_i32_0 = arith.constant 0 : i32
    return %arg0, %c0_i32 : i32, i32
  }
  func.func @transform_3(%arg0: i32) -> (i32, i32) {
    %c0_i32 = arith.constant 0 : i32
    %c0_i32_0 = arith.constant 0 : i32
    return %arg0, %c0_i32 : i32, i32
  }
}

</mosaic_0001>

<llo_original>
// kernel: _lambda_.2
$region0: #{_lambda_.2}
  #allocation0 [shape = 'u32[]', space=smem, size = 0x4, offset = 0x4, fixed_abs, tag = 'smem constant byte address 0x4 - core index']
  #allocation1 [shape = 'u32[144,128]{1,0:T(1,128)}', space=vmem, size = 0x12000, scoped, tag = 'internal scratch']
  #allocation2 [shape = 'f32[1,1]{1,0:T(1,128)S(6)}', space=smem, size = 0x200, scoped, tag = 'scoped memory for _lambda_.2']
  #allocation3 [shape = 'f32[1]{0:T(128)S(6)}', space=smem, size = 0x200, scoped, tag = 'scoped memory for _lambda_.2']
  #allocation4 [shape = 'u32[2048]{0}', space=vmem, size = 0x2000, scoped, tag = 'scoped memory for _lambda_.2']
  #allocation5 [shape = 'u32[2048]{0}', space=vmem, size = 0x2000, scoped, tag = 'scoped memory for _lambda_.2']
  #allocation6 [shape = 'u32[2048]{0}', space=vmem, size = 0x2000, scoped, tag = 'scoped memory for _lambda_.2']
  #allocation7 [shape = 'u32[2048]{0}', space=vmem, size = 0x2000, scoped, tag = 'scoped memory for _lambda_.2']
  #allocation8 [shape = 'u32[2048]{0}', space=vmem, size = 0x2000, scoped, tag = 'scoped memory for _lambda_.2']
  %s0 = inlined_call_operand.<no memory space> [shape: f32[1,1], index: 0, kind: input, shape index: {}]
  %s1 = inlined_call_operand.<no memory space> [shape: f32[1], index: 1, kind: input, shape index: {}]
  %s2 = inlined_call_operand.vmem [shape: f32[8], index: 2, kind: input, shape index: {}]
  %s3 = inlined_call_operand.<no memory space> [shape: f32[], index: 3, kind: input, shape index: {}]
  %s4 = inlined_call_operand.vmem [shape: f32[1,128], index: 4, kind: output, shape index: {}]
  %s5 = sld [smem:[#allocation0]]
  $region22: #{_lambda_.2} parent=0
    _
  %s7 = ssub.s32 1, %s5
  %s8 = scalar_select 0, %s7, %s5
  %9 = sst [smem:[#allocation2]] %s0
  %10 = sst [smem:[#allocation3]] %s1
  %v11 = vstv %s3
  $region1: #{_lambda_.2} parent=0
    #allocation9 [shape = 'u8[512]{0}', space=vmem, size = 0x400, dematerialized = true, scoped, tag = 'FusionAdapter Buffer %fusion.1 = f32[1,128]{1,0:T(1,128)} fusion(%param_2.2, %param_3), kind=kLoop, calls=%fused_computation.1.clone, metadata={op_name="jit(<lambda>)/reshape" stack_frame_id=11}']
    // Predicated region
    $region2: #{_lambda_.2} parent=1 // pred_check
      _
    $region3: #{_lambda_.2} parent=1 // pred_check_branch
      %13 = sbr.rel (0) target = $region5
    $region4: #{_lambda_.2} parent=1 // pred_region
      _
    $region5: #{_lambda_.2} parent=1 // pred_fallthru
      _
    // Predicated region
    $region6: #{_lambda_.2} parent=1 // pred_check
      _
    $region7: #{_lambda_.2} parent=1 // pred_check_branch
      %15 = sbr.rel (0) target = $region9
    $region8: #{_lambda_.2} parent=1 // pred_region
      _
    $region9: #{_lambda_.2} parent=1 // pred_fallthru
      _
    // Predicated region
    $region10: #{_lambda_.2} parent=1 // pred_check
      _
    $region11: #{_lambda_.2} parent=1 // pred_check_branch
      %17 = sbr.rel (0) target = $region13
    $region12: #{_lambda_.2} parent=1 // pred_region
      _
    $region13: #{_lambda_.2} parent=1 // pred_fallthru
      _
    %v18 = vld [vmem:[%s2] sm:$0x1]
    %v19 = vlaneseq
    %vm21 = vcmp.lt.s32.totalorder %v19, 8
    %v22 = vsel %vm21, %v18, %v11
    %s24 = ssub.s32 2, 1
    %25 = vst [vmem:[#allocation9] sm:%s24] %v22
    %v26 = vld [vmem:[#allocation9] sm:$0x1]
    %s27 = sld [smem:[#allocation2]]
    %v28 = vstv %s27
    %v29 = vmul.f32 %v26, %v28
    %s30 = sld [smem:[#allocation3]]
    %v31 = vstv %s30
    %v32 = vadd.f32 %v29, %v31
    %33 = vst [vmem:[%s4] sm:$0x1] %v32
    // Predicated region
    $region14: #{_lambda_.2} parent=1 // pred_check
      _
    $region15: #{_lambda_.2} parent=1 // pred_check_branch
      %35 = sbr.rel (0) target = $region17
    $region16: #{_lambda_.2} parent=1 // pred_region
      _
    $region17: #{_lambda_.2} parent=1 // pred_fallthru
      _
    // Predicated region
    $region18: #{_lambda_.2} parent=1 // pred_check
      _
    $region19: #{_lambda_.2} parent=1 // pred_check_branch
      %37 = sbr.rel (0) target = $region21
    $region20: #{_lambda_.2} parent=1 // pred_region
      _
    $region21: #{_lambda_.2} parent=1 // pred_fallthru
      _

</llo_original>
